<compile_context>
chip_gen: v7x
topology: tpu7x:2x2x1
jax: 0.10.0
libtpu: 0.0.40
codegen_flags: <defaults>
</compile_context>

<pallas_src>
import functools

import jax
import jax.numpy as jnp
from jax.experimental import pallas as pl
from jax.experimental.pallas import tpu as pltpu

INPUT_SIZE = 5          # module default input_size=5
H_DIM = (8, 8)          # module default h_dim=[8, 8]
Z_DIM = 8               # module default z_dim=8  -> uses MyMonotoneNN_dim8
HZ = 4                  # module default hz_dim=[4]
N_INT = 100             # forward default N=100
LOWER_BOUND = -5.0      # forward default lower_bound=-5.0
N_PAD = 128             # integration steps padded onto one full 128-lane axis
MAX_BLOCK_BATCH = 512   # per-step batch tile cap; working set fits VMEM on v5e/v6e/v7x
N_SCALARS = 16          # packed monotone-net scalars: mw1(4)|mb1(4)|mw2(4)|mb2(1)|pad(3)


def _round_up(n, m):
    return ((n + m - 1) // m) * m


def _pick_block_batch(batch, min_grid_steps=1):
    """Smallest number of grid steps subject to the tile cap; rows padded to x8."""
    steps = max(min_grid_steps, -(-batch // MAX_BLOCK_BATCH))
    return max(8, _round_up(-(-batch // steps), 8))


def _mnn_mlp_kernel(n_steps, lower_bound, compute_dtype,
                    x_ref, w0_ref, b0_ref, w1_ref, b1_ref, w2_ref, b2_ref,
                    msc_ref, mbias_ref, o_ref):
    x = x_ref[...]                                                      # (TB, 5)

    # --- self.net: Linear -> ReLU -> Linear -> ReLU -> Linear (trailing ReLU popped) ---
    h = jnp.dot(x, w0_ref[...], preferred_element_type=jnp.float32) + b0_ref[...]
    h = jnp.maximum(h, 0.0)
    h = jnp.dot(h, w1_ref[...], preferred_element_type=jnp.float32) + b1_ref[...]
    h = jnp.maximum(h, 0.0)
    z = jnp.dot(h, w2_ref[...], preferred_element_type=jnp.float32) + b2_ref[...]  # (TB, Z)

    # --- self.mnn(z, N, lower_bound) ---
    # TODO(synk): MyMonotoneNN_dim8 source is not provided; reconstructed as the
    # standard UMNN-style elementwise monotone map
    #   y_d = bias_d + \int_{lower_bound}^{z_d} f(t) dt,  f = softplus(1->HZ->1 net) > 0,
    # integrated with an N-point midpoint rule.
    inv_n = 1.0 / float(n_steps)
    span = z - lower_bound                                              # (TB, Z)
    dt = span * inv_n                                                   # (TB, Z)

    # Tiny per-lane constants (computed once per grid step; no full-volume int32
    # iota / convert / compare): quadrature abscissa u_k = (k+0.5)/N and a 0/1
    # mask that zeros the padded lanes after the integrand is evaluated.
    lane = jax.lax.broadcasted_iota(jnp.int32, (1, 1, N_PAD), 2)
    u = (lane.astype(jnp.float32) + 0.5) * inv_n                        # (1, 1, N_PAD)
    lane_mask = (lane < n_steps).astype(jnp.float32)                    # (1, 1, N_PAD)

    # (TB, Z, N_PAD): Z=8 on the sublanes, quadrature points dense on the 128 lanes.
    t = (lower_bound + u * span[:, :, None]).astype(compute_dtype)

    # Integrand: softplus(mb2 + sum_j mw2_j * tanh(mw1_j * t + mb1_j)).
    # Scalars come packed in one 1-D SMEM f32[16]: [mw1(4) | mb1(4) | mw2(4) | mb2].
    s = None
    for j in range(HZ):                                                 # HZ=4, unrolled
        mw1_j = msc_ref[j].astype(compute_dtype)
        mb1_j = msc_ref[HZ + j].astype(compute_dtype)
        term = msc_ref[2 * HZ + j] * jnp.tanh(t * mw1_j + mb1_j).astype(jnp.float32)
        s = term if s is None else s + term
    s = s + msc_ref[3 * HZ]                                             # (TB, Z, N_PAD) f32

    # Numerically-stable softplus; the exp/log1p run on the EUP in compute_dtype,
    # the max/add and everything downstream accumulate in f32.
    e = jnp.exp((-jnp.abs(s)).astype(compute_dtype))
    f = jnp.maximum(s, 0.0) + jnp.log1p(e).astype(jnp.float32)
    f = f * lane_mask                                                   # zero padded lanes

    integral = jnp.sum(f, axis=-1) * dt                                 # (TB, Z), f32
    y = integral + mbias_ref[...]

    # --- self.out: Sigmoid (loglogLink=False) ---
    o_ref[...] = (1.0 / (1.0 + jnp.exp(-y))).astype(o_ref.dtype)


def mnn_mlp_forward(x, params, N=N_INT, lower_bound=LOWER_BOUND, block_batch=None,
                    core_parallel=False, bf16_integrand=False):
    assert N <= N_PAD, "integration steps must fit on one 128-lane axis"
    batch = x.shape[0]
    if block_batch is None:
        block_batch = _pick_block_batch(batch, 2 if core_parallel else 1)
    pad = (-batch) % block_batch
    if pad:                                   # padded rows are computed then dropped
        x = jnp.pad(x, ((0, pad), (0, 0)))
    padded = batch + pad
    grid = (padded // block_batch,)

    # Pack the tiny monotone-net scalars into one 1-D SMEM array (64 B vs ~16 KiB
    # of padded 2-D SMEM refs, and a single prefetch instead of four).
    msc = jnp.concatenate([params["mw1"].reshape(-1), params["mb1"].reshape(-1),
                           params["mw2"].reshape(-1), params["mb2"].reshape(-1)])
    msc = jnp.pad(msc, (0, N_SCALARS - msc.shape[0])).astype(jnp.float32)

    def resident(arr):                        # whole array, constant block index:
        return pl.BlockSpec(arr.shape, lambda i: (0, 0))   # stays in VMEM across steps

    smem = pl.BlockSpec(memory_space=pltpu.MemorySpace.SMEM)
    compute_dtype = jnp.bfloat16 if bf16_integrand else jnp.float32
    kernel = functools.partial(_mnn_mlp_kernel, int(N), float(lower_bound), compute_dtype)

    # "parallel" is a no-op hint on single-TC v5e/v6e; on v7x pass core_parallel=True
    # to shard the (>=2-step) batch grid across both TensorCores.
    batch_sem = pltpu.CORE_PARALLEL if core_parallel else "parallel"

    out = pl.pallas_call(
        kernel,
        out_shape=jax.ShapeDtypeStruct((padded, Z_DIM), jnp.float32),
        grid=grid,
        in_specs=[
            pl.BlockSpec((block_batch, INPUT_SIZE), lambda i: (i, 0)),   # x tile
            resident(params["w0"]), resident(params["b0"]),
            resident(params["w1"]), resident(params["b1"]),
            resident(params["w2"]), resident(params["b2"]),
            smem,                                                        # packed scalars
            resident(params["mbias"]),
        ],
        out_specs=pl.BlockSpec((block_batch, Z_DIM), lambda i: (i, 0)),
        compiler_params=pltpu.CompilerParams(
            dimension_semantics=(batch_sem,),
            vmem_limit_bytes=48 << 20,        # < v7x's 64 MiB physical; ample on v5e/v6e
        ),
    )(x, params["w0"], params["b0"], params["w1"], params["b1"],
      params["w2"], params["b2"], msc, params["mbias"])
    return out[:batch]


def init_params(key):
    """Deterministic synthetic parameters matching the module's shapes."""
    ks = jax.random.split(key, 12)
    hs = [INPUT_SIZE] + list(H_DIM) + [Z_DIM]

    def linear(kw, kb, fan_in, fan_out):
        bound = 1.0 / jnp.sqrt(fan_in)
        w = jax.random.uniform(kw, (fan_in, fan_out), jnp.float32, -bound, bound)
        b = jax.random.uniform(kb, (1, fan_out), jnp.float32, -bound, bound)
        return w, b

    w0, b0 = linear(ks[0], ks[1], hs[0], hs[1])
    w1, b1 = linear(ks[2], ks[3], hs[1], hs[2])
    w2, b2 = linear(ks[4], ks[5], hs[2], hs[3])
    # monotone-net params: 1 -> HZ -> 1, plus a per-output-dim bias
    mw1 = jax.random.normal(ks[6], (1, HZ), jnp.float32) * 0.5
    mb1 = jax.random.normal(ks[7], (1, HZ), jnp.float32) * 0.5
    mw2 = jax.random.normal(ks[8], (1, HZ), jnp.float32) * 0.5
    mb2 = jax.random.normal(ks[9], (1, 1), jnp.float32) * 0.5
    mbias = jax.random.normal(ks[10], (1, Z_DIM), jnp.float32) * 0.1
    return dict(w0=w0, b0=b0, w1=w1, b1=b1, w2=w2, b2=b2,
                mw1=mw1, mb1=mb1, mw2=mw2, mb2=mb2, mbias=mbias)


def reference_forward(x, p, N=N_INT, lower_bound=LOWER_BOUND):
    """Pure-JAX reference of the same math, for correctness checking."""
    h = jnp.maximum(x @ p["w0"] + p["b0"], 0.0)
    h = jnp.maximum(h @ p["w1"] + p["b1"], 0.0)
    z = h @ p["w2"] + p["b2"]
    dt = (z - lower_bound) / N
    k = (jnp.arange(N, dtype=jnp.float32) + 0.5)[None, :, None]
    t = lower_bound + k * dt[:, None, :]
    s = p["mb2"][0, 0]
    s = s + jnp.sum(p["mw2"][0][None, None, None, :]
                    * jnp.tanh(t[..., None] * p["mw1"][0][None, None, None, :]
                               + p["mb1"][0][None, None, None, :]), axis=-1)
    f = jax.nn.softplus(s)
    y = jnp.sum(f, axis=1) * dt + p["mbias"]
    return jax.nn.sigmoid(y)


if __name__ == "__main__":
    key = jax.random.PRNGKey(0)
    kx, kp = jax.random.split(key)
    batch = 16
    x = jax.random.normal(kx, (batch, INPUT_SIZE), jnp.float32)
    params = init_params(kp)
    ref = reference_forward(x, params)

    # Explicit block_batch=8 so the 1-D batch grid is actually exercised (grid=(2,)).
    out = mnn_mlp_forward(x, params, block_batch=8)
    out = jax.block_until_ready(out)
    assert out.shape == (batch, Z_DIM)
    assert jnp.allclose(out, ref, rtol=1e-4, atol=1e-4), "mismatch vs JAX reference"

    # Default adaptive tiling path (single grid step here) must also match.
    out2 = jax.block_until_ready(mnn_mlp_forward(x, params))
    assert jnp.allclose(out2, ref, rtol=1e-4, atol=1e-4), "mismatch vs JAX reference"

    print("KERNEL_OK")
</pallas_src>

<mosaic_0001>
module attributes {stable_mosaic.version = 11 : i64} {
  func.func @_mnn_mlp_kernel(%arg0: i32, %arg1: memref<8x5xf32, #tpu.memory_space<vmem>>, %arg2: memref<5x8xf32, #tpu.memory_space<vmem>>, %arg3: memref<1x8xf32, #tpu.memory_space<vmem>>, %arg4: memref<8x8xf32, #tpu.memory_space<vmem>>, %arg5: memref<1x8xf32, #tpu.memory_space<vmem>>, %arg6: memref<8x8xf32, #tpu.memory_space<vmem>>, %arg7: memref<1x8xf32, #tpu.memory_space<vmem>>, %arg8: memref<16xf32, #tpu.memory_space<smem>>, %arg9: memref<1x8xf32, #tpu.memory_space<vmem>>, %arg10: memref<8x8xf32, #tpu.memory_space<vmem>>) attributes {dimension_semantics = [#tpu.dimension_semantics<parallel>], iteration_bounds = array<i64: 2>, scalar_prefetch = 0 : i64, scratch_operands = 0 : i64, tpu.core_type = #tpu.core_type<tc>, window_params = [{transform_indices = @transform_0, window_bounds = array<i64: 8, 5>}, {pipeline_mode = #tpu.pipeline_mode<synchronous>, transform_indices = @transform_1, window_bounds = array<i64: 5, 8>}, {pipeline_mode = #tpu.pipeline_mode<synchronous>, transform_indices = @transform_2, window_bounds = array<i64: 1, 8>}, {pipeline_mode = #tpu.pipeline_mode<synchronous>, transform_indices = @transform_3, window_bounds = array<i64: 8, 8>}, {pipeline_mode = #tpu.pipeline_mode<synchronous>, transform_indices = @transform_4, window_bounds = array<i64: 1, 8>}, {pipeline_mode = #tpu.pipeline_mode<synchronous>, transform_indices = @transform_5, window_bounds = array<i64: 8, 8>}, {pipeline_mode = #tpu.pipeline_mode<synchronous>, transform_indices = @transform_6, window_bounds = array<i64: 1, 8>}, {transform_indices = @transform_7, window_bounds = array<i64: 16>}, {pipeline_mode = #tpu.pipeline_mode<synchronous>, transform_indices = @transform_8, window_bounds = array<i64: 1, 8>}, {transform_indices = @transform_9, window_bounds = array<i64: 8, 8>}]} {
    %c0 = arith.constant 0 : index
    %c0_0 = arith.constant 0 : index
    %0 = vector.load %arg1[%c0, %c0_0] : memref<8x5xf32, #tpu.memory_space<vmem>>, vector<8x5xf32>
    %c0_1 = arith.constant 0 : index
    %c0_2 = arith.constant 0 : index
    %1 = vector.load %arg2[%c0_1, %c0_2] : memref<5x8xf32, #tpu.memory_space<vmem>>, vector<5x8xf32>
    %cst = arith.constant dense<0.000000e+00> : vector<8x8xf32>
    %2 = tpu.matmul %0, %1, %cst {dimension_numbers = #tpu.dot_dimension_numbers<[1], [0], [0], [1], [0, 0, 1, 1], [], []>} : vector<8x5xf32>, vector<5x8xf32>, vector<8x8xf32> -> vector<8x8xf32>
    %c0_3 = arith.constant 0 : index
    %c0_4 = arith.constant 0 : index
    %3 = vector.load %arg3[%c0_3, %c0_4] : memref<1x8xf32, #tpu.memory_space<vmem>>, vector<1x8xf32>
    %4 = vector.broadcast %3 : vector<1x8xf32> to vector<8x8xf32>
    %5 = arith.addf %2, %4 : vector<8x8xf32>
    %cst_5 = arith.constant 0.000000e+00 : f32
    %6 = vector.broadcast %cst_5 : f32 to vector<8x8xf32>
    %7 = arith.maximumf %5, %6 : vector<8x8xf32>
    %c0_6 = arith.constant 0 : index
    %c0_7 = arith.constant 0 : index
    %8 = vector.load %arg4[%c0_6, %c0_7] : memref<8x8xf32, #tpu.memory_space<vmem>>, vector<8x8xf32>
    %cst_8 = arith.constant dense<0.000000e+00> : vector<8x8xf32>
    %9 = tpu.matmul %7, %8, %cst_8 {dimension_numbers = #tpu.dot_dimension_numbers<[1], [0], [0], [1], [0, 0, 1, 1], [], []>} : vector<8x8xf32>, vector<8x8xf32>, vector<8x8xf32> -> vector<8x8xf32>
    %c0_9 = arith.constant 0 : index
    %c0_10 = arith.constant 0 : index
    %10 = vector.load %arg5[%c0_9, %c0_10] : memref<1x8xf32, #tpu.memory_space<vmem>>, vector<1x8xf32>
    %11 = vector.broadcast %10 : vector<1x8xf32> to vector<8x8xf32>
    %12 = arith.addf %9, %11 : vector<8x8xf32>
    %cst_11 = arith.constant 0.000000e+00 : f32
    %13 = vector.broadcast %cst_11 : f32 to vector<8x8xf32>
    %14 = arith.maximumf %12, %13 : vector<8x8xf32>
    %c0_12 = arith.constant 0 : index
    %c0_13 = arith.constant 0 : index
    %15 = vector.load %arg6[%c0_12, %c0_13] : memref<8x8xf32, #tpu.memory_space<vmem>>, vector<8x8xf32>
    %cst_14 = arith.constant dense<0.000000e+00> : vector<8x8xf32>
    %16 = tpu.matmul %14, %15, %cst_14 {dimension_numbers = #tpu.dot_dimension_numbers<[1], [0], [0], [1], [0, 0, 1, 1], [], []>} : vector<8x8xf32>, vector<8x8xf32>, vector<8x8xf32> -> vector<8x8xf32>
    %c0_15 = arith.constant 0 : index
    %c0_16 = arith.constant 0 : index
    %17 = vector.load %arg7[%c0_15, %c0_16] : memref<1x8xf32, #tpu.memory_space<vmem>>, vector<1x8xf32>
    %18 = vector.broadcast %17 : vector<1x8xf32> to vector<8x8xf32>
    %19 = arith.addf %16, %18 : vector<8x8xf32>
    %cst_17 = arith.constant -5.000000e+00 : f32
    %20 = vector.broadcast %cst_17 : f32 to vector<8x8xf32>
    %21 = arith.subf %19, %20 : vector<8x8xf32>
    %cst_18 = arith.constant 0.00999999977 : f32
    %22 = vector.broadcast %cst_18 : f32 to vector<8x8xf32>
    %23 = arith.mulf %21, %22 : vector<8x8xf32>
    %24 = tpu.iota {dimensions = array<i32: 2>} : vector<1x1x128xi32>
    %25 = arith.sitofp %24 : vector<1x1x128xi32> to vector<1x1x128xf32>
    %cst_19 = arith.constant 5.000000e-01 : f32
    %26 = vector.broadcast %cst_19 : f32 to vector<1x1x128xf32>
    %27 = arith.addf %25, %26 : vector<1x1x128xf32>
    %cst_20 = arith.constant 0.00999999977 : f32
    %28 = vector.broadcast %cst_20 : f32 to vector<1x1x128xf32>
    %29 = arith.mulf %27, %28 : vector<1x1x128xf32>
    %c100_i32 = arith.constant 100 : i32
    %30 = vector.broadcast %c100_i32 : i32 to vector<1x1x128xi32>
    %31 = arith.cmpi slt, %24, %30 : vector<1x1x128xi32>
    %32 = arith.extui %31 : vector<1x1x128xi1> to vector<1x1x128xi32>
    %33 = arith.sitofp %32 : vector<1x1x128xi32> to vector<1x1x128xf32>
    %34 = vector.shape_cast %21 : vector<8x8xf32> to vector<8x8x1xf32>
    %35 = vector.broadcast %29 : vector<1x1x128xf32> to vector<8x8x128xf32>
    %36 = vector.broadcast %34 : vector<8x8x1xf32> to vector<8x8x128xf32>
    %37 = arith.mulf %35, %36 : vector<8x8x128xf32>
    %cst_21 = arith.constant -5.000000e+00 : f32
    %38 = vector.broadcast %cst_21 : f32 to vector<8x8x128xf32>
    %39 = arith.addf %38, %37 : vector<8x8x128xf32>
    %c0_22 = arith.constant 0 : index
    %40 = memref.load %arg8[%c0_22] : memref<16xf32, #tpu.memory_space<smem>>
    %c4 = arith.constant 4 : index
    %41 = memref.load %arg8[%c4] : memref<16xf32, #tpu.memory_space<smem>>
    %c8 = arith.constant 8 : index
    %42 = memref.load %arg8[%c8] : memref<16xf32, #tpu.memory_space<smem>>
    %43 = vector.broadcast %40 : f32 to vector<8x8x128xf32>
    %44 = arith.mulf %39, %43 : vector<8x8x128xf32>
    %45 = vector.broadcast %41 : f32 to vector<8x8x128xf32>
    %46 = arith.addf %44, %45 : vector<8x8x128xf32>
    %47 = math.tanh %46 : vector<8x8x128xf32>
    %48 = vector.broadcast %42 : f32 to vector<8x8x128xf32>
    %49 = arith.mulf %48, %47 : vector<8x8x128xf32>
    %c1 = arith.constant 1 : index
    %50 = memref.load %arg8[%c1] : memref<16xf32, #tpu.memory_space<smem>>
    %c5 = arith.constant 5 : index
    %51 = memref.load %arg8[%c5] : memref<16xf32, #tpu.memory_space<smem>>
    %c9 = arith.constant 9 : index
    %52 = memref.load %arg8[%c9] : memref<16xf32, #tpu.memory_space<smem>>
    %53 = vector.broadcast %50 : f32 to vector<8x8x128xf32>
    %54 = arith.mulf %39, %53 : vector<8x8x128xf32>
    %55 = vector.broadcast %51 : f32 to vector<8x8x128xf32>
    %56 = arith.addf %54, %55 : vector<8x8x128xf32>
    %57 = math.tanh %56 : vector<8x8x128xf32>
    %58 = vector.broadcast %52 : f32 to vector<8x8x128xf32>
    %59 = arith.mulf %58, %57 : vector<8x8x128xf32>
    %60 = arith.addf %49, %59 : vector<8x8x128xf32>
    %c2 = arith.constant 2 : index
    %61 = memref.load %arg8[%c2] : memref<16xf32, #tpu.memory_space<smem>>
    %c6 = arith.constant 6 : index
    %62 = memref.load %arg8[%c6] : memref<16xf32, #tpu.memory_space<smem>>
    %c10 = arith.constant 10 : index
    %63 = memref.load %arg8[%c10] : memref<16xf32, #tpu.memory_space<smem>>
    %64 = vector.broadcast %61 : f32 to vector<8x8x128xf32>
    %65 = arith.mulf %39, %64 : vector<8x8x128xf32>
    %66 = vector.broadcast %62 : f32 to vector<8x8x128xf32>
    %67 = arith.addf %65, %66 : vector<8x8x128xf32>
    %68 = math.tanh %67 : vector<8x8x128xf32>
    %69 = vector.broadcast %63 : f32 to vector<8x8x128xf32>
    %70 = arith.mulf %69, %68 : vector<8x8x128xf32>
    %71 = arith.addf %60, %70 : vector<8x8x128xf32>
    %c3 = arith.constant 3 : index
    %72 = memref.load %arg8[%c3] : memref<16xf32, #tpu.memory_space<smem>>
    %c7 = arith.constant 7 : index
    %73 = memref.load %arg8[%c7] : memref<16xf32, #tpu.memory_space<smem>>
    %c11 = arith.constant 11 : index
    %74 = memref.load %arg8[%c11] : memref<16xf32, #tpu.memory_space<smem>>
    %75 = vector.broadcast %72 : f32 to vector<8x8x128xf32>
    %76 = arith.mulf %39, %75 : vector<8x8x128xf32>
    %77 = vector.broadcast %73 : f32 to vector<8x8x128xf32>
    %78 = arith.addf %76, %77 : vector<8x8x128xf32>
    %79 = math.tanh %78 : vector<8x8x128xf32>
    %80 = vector.broadcast %74 : f32 to vector<8x8x128xf32>
    %81 = arith.mulf %80, %79 : vector<8x8x128xf32>
    %82 = arith.addf %71, %81 : vector<8x8x128xf32>
    %c12 = arith.constant 12 : index
    %83 = memref.load %arg8[%c12] : memref<16xf32, #tpu.memory_space<smem>>
    %84 = vector.broadcast %83 : f32 to vector<8x8x128xf32>
    %85 = arith.addf %82, %84 : vector<8x8x128xf32>
    %86 = math.absf %85 : vector<8x8x128xf32>
    %cst_23 = arith.constant 0.000000e+00 : f32
    %87 = vector.broadcast %cst_23 : f32 to vector<8x8x128xf32>
    %88 = arith.subf %87, %86 : vector<8x8x128xf32>
    %89 = math.exp %88 : vector<8x8x128xf32>
    %cst_24 = arith.constant 0.000000e+00 : f32
    %90 = vector.broadcast %cst_24 : f32 to vector<8x8x128xf32>
    %91 = arith.maximumf %85, %90 : vector<8x8x128xf32>
    %92 = math.log1p %89 : vector<8x8x128xf32>
    %93 = arith.addf %91, %92 : vector<8x8x128xf32>
    %94 = vector.broadcast %33 : vector<1x1x128xf32> to vector<8x8x128xf32>
    %95 = arith.mulf %93, %94 : vector<8x8x128xf32>
    %cst_25 = arith.constant dense<0.000000e+00> : vector<8x8xf32>
    %96 = vector.multi_reduction <add>, %95, %cst_25 [2] : vector<8x8x128xf32> to vector<8x8xf32>
    %97 = arith.mulf %96, %23 : vector<8x8xf32>
    %c0_26 = arith.constant 0 : index
    %c0_27 = arith.constant 0 : index
    %98 = vector.load %arg9[%c0_26, %c0_27] : memref<1x8xf32, #tpu.memory_space<vmem>>, vector<1x8xf32>
    %99 = vector.broadcast %98 : vector<1x8xf32> to vector<8x8xf32>
    %100 = arith.addf %97, %99 : vector<8x8xf32>
    %cst_28 = arith.constant 0.000000e+00 : f32
    %101 = vector.broadcast %cst_28 : f32 to vector<8x8xf32>
    %102 = arith.subf %101, %100 : vector<8x8xf32>
    %103 = math.exp %102 : vector<8x8xf32>
    %cst_29 = arith.constant 1.000000e+00 : f32
    %104 = vector.broadcast %cst_29 : f32 to vector<8x8xf32>
    %105 = arith.addf %104, %103 : vector<8x8xf32>
    %cst_30 = arith.constant 1.000000e+00 : f32
    %106 = vector.broadcast %cst_30 : f32 to vector<8x8xf32>
    %107 = arith.divf %106, %105 : vector<8x8xf32>
    %c0_31 = arith.constant 0 : index
    %c0_32 = arith.constant 0 : index
    %108 = vector.load %arg10[%c0_31, %c0_32] : memref<8x8xf32, #tpu.memory_space<vmem>>, vector<8x8xf32>
    tpu.vector_store %arg10[%c0_31, %c0_32], %107 {strides = array<i32>} : memref<8x8xf32, #tpu.memory_space<vmem>>, vector<8x8xf32>,
    return
  }
  func.func @transform_0(%arg0: i32) -> (i32, i32) {
    %c0_i32 = arith.constant 0 : i32
    %c0_i32_0 = arith.constant 0 : i32
    return %arg0, %c0_i32 : i32, i32
  }
  func.func @transform_1(%arg0: i32) -> (i32, i32) {
    %c0_i32 = arith.constant 0 : i32
    %c0_i32_0 = arith.constant 0 : i32
    %c0_i32_1 = arith.constant 0 : i32
    return %c0_i32, %c0_i32_0 : i32, i32
  }
  func.func @transform_2(%arg0: i32) -> (i32, i32) {
    %c0_i32 = arith.constant 0 : i32
    %c0_i32_0 = arith.constant 0 : i32
    %c0_i32_1 = arith.constant 0 : i32
    return %c0_i32, %c0_i32_0 : i32, i32
  }
  func.func @transform_3(%arg0: i32) -> (i32, i32) {
    %c0_i32 = arith.constant 0 : i32
    %c0_i32_0 = arith.constant 0 : i32
    %c0_i32_1 = arith.constant 0 : i32
    return %c0_i32, %c0_i32_0 : i32, i32
  }
  func.func @transform_4(%arg0: i32) -> (i32, i32) {
    %c0_i32 = arith.constant 0 : i32
    %c0_i32_0 = arith.constant 0 : i32
    %c0_i32_1 = arith.constant 0 : i32
    return %c0_i32, %c0_i32_0 : i32, i32
  }
  func.func @transform_5(%arg0: i32) -> (i32, i32) {
    %c0_i32 = arith.constant 0 : i32
    %c0_i32_0 = arith.constant 0 : i32
    %c0_i32_1 = arith.constant 0 : i32
    return %c0_i32, %c0_i32_0 : i32, i32
  }
  func.func @transform_6(%arg0: i32) -> (i32, i32) {
    %c0_i32 = arith.constant 0 : i32
    %c0_i32_0 = arith.constant 0 : i32
    %c0_i32_1 = arith.constant 0 : i32
    return %c0_i32, %c0_i32_0 : i32, i32
  }
  func.func @transform_7(%arg0: i32) -> i32 {
    %c0_i32 = arith.constant 0 : i32
    %c0_i32_0 = arith.constant 0 : i32
    return %c0_i32 : i32
  }
  func.func @transform_8(%arg0: i32) -> (i32, i32) {
    %c0_i32 = arith.constant 0 : i32
    %c0_i32_0 = arith.constant 0 : i32
    %c0_i32_1 = arith.constant 0 : i32
    return %c0_i32, %c0_i32_0 : i32, i32
  }
  func.func @transform_9(%arg0: i32) -> (i32, i32) {
    %c0_i32 = arith.constant 0 : i32
    %c0_i32_0 = arith.constant 0 : i32
    return %arg0, %c0_i32 : i32, i32
  }
}

</mosaic_0001>

<llo_original>
// kernel: tpu_custom_call.1
$region0: #{tpu_custom_call.1}
  #allocation0 [shape = 'u32[]', space=smem, size = 0x4, offset = 0x4, fixed_abs, tag = 'smem constant byte address 0x4 - core index']
  #allocation1 [shape = 'u32[144,128]{1,0:T(1,128)}', space=vmem, size = 0x12000, scoped, tag = 'internal scratch']
  %s0 = inlined_call_operand.vmem [shape: f32[16,5], index: 0, kind: input, shape index: {}]
  %s1 = inlined_call_operand.vmem [shape: f32[5,8], index: 1, kind: input, shape index: {}]
  %s2 = inlined_call_operand.vmem [shape: f32[1,8], index: 2, kind: input, shape index: {}]
  %s3 = inlined_call_operand.vmem [shape: f32[8,8], index: 3, kind: input, shape index: {}]
  %s4 = inlined_call_operand.vmem [shape: f32[1,8], index: 4, kind: input, shape index: {}]
  %s5 = inlined_call_operand.vmem [shape: f32[8,8], index: 5, kind: input, shape index: {}]
  %s6 = inlined_call_operand.vmem [shape: f32[1,8], index: 6, kind: input, shape index: {}]
  %s7 = inlined_call_operand.vmem [shape: f32[16], index: 7, kind: input, shape index: {}]
  %s8 = inlined_call_operand.vmem [shape: f32[1,8], index: 8, kind: input, shape index: {}]
  %s9 = inlined_call_operand.vmem [shape: f32[16,8], index: 9, kind: output, shape index: {}]
  %s10 = sld [smem:[#allocation0]]
  $region73: #{tpu_custom_call.1} parent=0
    _
  %s12 = ssub.s32 1, %s10
  %s13 = scalar_select 0, %s12, %s10
  $region1: #{tpu_custom_call.1} parent=0
    #allocation2 [shape = 'u8[512]{0}', space=smem, size = 0x200, scoped, tag = 'input window, operand 7, single buffered']
    #allocation3 [shape = 's32[2]{0}', space=sflag, size = 0x8, scoped, tag = 'scoped memory for tpu_custom_call.1']
    %14 = vsyncpa [#allocation3], 0
    loop: start=0, step=1, limit=4
    $region2: #{tpu_custom_call.1} parent=1 // loop_pre_header
      _
    $region3: #{tpu_custom_call.1} parent=1 // loop_header
      %s16 = sphi 0, %s20
      %p17 = scmp.ge.s32.totalorder %s16, 4
      %s26 = sphi 0, %s28
      %s29 = sphi 0, %s26
      %s30 = sphi 0, %s29
      %s46 = sphi 0, %s30
      %s50 = sphi 0, %s50
      %s52 = sphi 0, %s50
      %s53 = sphi 0, %s52
      %s67 = sphi 0, %s53
      %s71 = sphi 0, %s71
      %s73 = sphi 0, %s71
      %s74 = sphi 0, %s73
      %s88 = sphi 0, %s74
      %s92 = sphi 0, %s92
      %s94 = sphi 0, %s92
      %s95 = sphi 0, %s94
      %s109 = sphi 0, %s95
      %s113 = sphi 0, %s113
      %s115 = sphi 0, %s113
      %s116 = sphi 0, %s115
      %s130 = sphi 0, %s116
      %s134 = sphi 0, %s134
      %s136 = sphi 0, %s134
      %s137 = sphi 0, %s136
      %s151 = sphi 0, %s137
      %s155 = sphi 0, %s155
      %s157 = sphi 0, %s155
      %s158 = sphi 0, %s157
      %s172 = sphi 0, %s158
      %s176 = sphi 0, %s176
      %s178 = sphi 0, %s176
      %s179 = sphi 0, %s178
      %s193 = sphi 0, %s179
      %s197 = sphi 0, %s197
      %s199 = sphi 0, %s197
      %s200 = sphi 0, %s199
      %s214 = sphi 0, %s200
      %s220 = sphi 0, %s222
      %s223 = sphi 0, %s220
      %s224 = sphi 0, %s223
      %s240 = sphi 0, %s224
    $region4: #{tpu_custom_call.1} parent=1 // loop_header_branch
      %19 = sbr.rel (%p17) target = $region8
    $region5: #{tpu_custom_call.1} parent=1 // loop_body
      %s21 = ssub.s32 %s16, 1
      %s22 = ssub.s32 %s16, 2
      %s23 = sadd.s32 %s16, 1
      %s24 = ssub.s32 %s16, %s23
      %p25 = scmp.eq.s32.totalorder %s24, 0
      %s27 = sadd.s32 %s26, 1
      %s28 = scalar_select %p25, %s26, %s27
      %p31 = pneg %p25
      %p32 = scmp.eq.s32.totalorder %s16, 1
      %p33 = por %p31, %p32
      %p34 = scmp.ne.s32.totalorder %s26, %s29
      %p35 = scmp.eq.s32.totalorder %s16, 0
      %p36 = por %p34, %p35
      %p37 = scmp.ne.s32.totalorder %s26, %s29
      %p38 = scmp.eq.s32.totalorder %s21, 1
      %p39 = por %p37, %p38
      %p40 = scmp.ne.s32.totalorder %s29, %s30
      %p41 = scmp.eq.s32.totalorder %s21, 0
      %p42 = por %p40, %p41
      %p43 = scmp.ne.s32.totalorder %s29, %s30
      %p44 = scmp.eq.s32.totalorder %s22, 1
      %p45 = por %p43, %p44
      %p47 = scmp.ne.s32.totalorder %s30, %s46
      %p48 = scmp.eq.s32.totalorder %s22, 0
      %p49 = por %p47, %p48
      %s51 = sadd.s32 %s50, 1
      %p54 = scmp.eq.s32.totalorder %s16, 1
      %p55 = scmp.ne.s32.totalorder %s50, %s52
      %p56 = scmp.eq.s32.totalorder %s16, 0
      %p57 = por %p55, %p56
      %p58 = scmp.ne.s32.totalorder %s50, %s52
      %p59 = scmp.eq.s32.totalorder %s21, 1
      %p60 = por %p58, %p59
      %p61 = scmp.ne.s32.totalorder %s52, %s53
      %p62 = scmp.eq.s32.totalorder %s21, 0
      %p63 = por %p61, %p62
      %p64 = scmp.ne.s32.totalorder %s52, %s53
      %p65 = scmp.eq.s32.totalorder %s22, 1
      %p66 = por %p64, %p65
      %p68 = scmp.ne.s32.totalorder %s53, %s67
      %p69 = scmp.eq.s32.totalorder %s22, 0
      %p70 = por %p68, %p69
      %s72 = sadd.s32 %s71, 1
      %p75 = scmp.eq.s32.totalorder %s16, 1
      %p76 = scmp.ne.s32.totalorder %s71, %s73
      %p77 = scmp.eq.s32.totalorder %s16, 0
      %p78 = por %p76, %p77
      %p79 = scmp.ne.s32.totalorder %s71, %s73
      %p80 = scmp.eq.s32.totalorder %s21, 1
      %p81 = por %p79, %p80
      %p82 = scmp.ne.s32.totalorder %s73, %s74
      %p83 = scmp.eq.s32.totalorder %s21, 0
      %p84 = por %p82, %p83
      %p85 = scmp.ne.s32.totalorder %s73, %s74
      %p86 = scmp.eq.s32.totalorder %s22, 1
      %p87 = por %p85, %p86
      %p89 = scmp.ne.s32.totalorder %s74, %s88
      %p90 = scmp.eq.s32.totalorder %s22, 0
      %p91 = por %p89, %p90
      %s93 = sadd.s32 %s92, 1
      %p96 = scmp.eq.s32.totalorder %s16, 1
      %p97 = scmp.ne.s32.totalorder %s92, %s94
      %p98 = scmp.eq.s32.totalorder %s16, 0
      %p99 = por %p97, %p98
      %p100 = scmp.ne.s32.totalorder %s92, %s94
      %p101 = scmp.eq.s32.totalorder %s21, 1
      %p102 = por %p100, %p101
      %p103 = scmp.ne.s32.totalorder %s94, %s95
      %p104 = scmp.eq.s32.totalorder %s21, 0
      %p105 = por %p103, %p104
      %p106 = scmp.ne.s32.totalorder %s94, %s95
      %p107 = scmp.eq.s32.totalorder %s22, 1
      %p108 = por %p106, %p107
      %p110 = scmp.ne.s32.totalorder %s95, %s109
      %p111 = scmp.eq.s32.totalorder %s22, 0
      %p112 = por %p110, %p111
      %s114 = sadd.s32 %s113, 1
      %p117 = scmp.eq.s32.totalorder %s16, 1
      %p118 = scmp.ne.s32.totalorder %s113, %s115
      %p119 = scmp.eq.s32.totalorder %s16, 0
      %p120 = por %p118, %p119
      %p121 = scmp.ne.s32.totalorder %s113, %s115
      %p122 = scmp.eq.s32.totalorder %s21, 1
      %p123 = por %p121, %p122
      %p124 = scmp.ne.s32.totalorder %s115, %s116
      %p125 = scmp.eq.s32.totalorder %s21, 0
      %p126 = por %p124, %p125
      %p127 = scmp.ne.s32.totalorder %s115, %s116
      %p128 = scmp.eq.s32.totalorder %s22, 1
      %p129 = por %p127, %p128
      %p131 = scmp.ne.s32.totalorder %s116, %s130
      %p132 = scmp.eq.s32.totalorder %s22, 0
      %p133 = por %p131, %p132
      %s135 = sadd.s32 %s134, 1
      %p138 = scmp.eq.s32.totalorder %s16, 1
      %p139 = scmp.ne.s32.totalorder %s134, %s136
      %p140 = scmp.eq.s32.totalorder %s16, 0
      %p141 = por %p139, %p140
      %p142 = scmp.ne.s32.totalorder %s134, %s136
      %p143 = scmp.eq.s32.totalorder %s21, 1
      %p144 = por %p142, %p143
      %p145 = scmp.ne.s32.totalorder %s136, %s137
      %p146 = scmp.eq.s32.totalorder %s21, 0
      %p147 = por %p145, %p146
      %p148 = scmp.ne.s32.totalorder %s136, %s137
      %p149 = scmp.eq.s32.totalorder %s22, 1
      %p150 = por %p148, %p149
      %p152 = scmp.ne.s32.totalorder %s137, %s151
      %p153 = scmp.eq.s32.totalorder %s22, 0
      %p154 = por %p152, %p153
      %s156 = sadd.s32 %s155, 1
      %p159 = scmp.eq.s32.totalorder %s16, 1
      %p160 = scmp.ne.s32.totalorder %s155, %s157
      %p161 = scmp.eq.s32.totalorder %s16, 0
      %p162 = por %p160, %p161
      %p163 = scmp.ne.s32.totalorder %s155, %s157
      %p164 = scmp.eq.s32.totalorder %s21, 1
      %p165 = por %p163, %p164
      %p166 = scmp.ne.s32.totalorder %s157, %s158
      %p167 = scmp.eq.s32.totalorder %s21, 0
      %p168 = por %p166, %p167
      %p169 = scmp.ne.s32.totalorder %s157, %s158
      %p170 = scmp.eq.s32.totalorder %s22, 1
      %p171 = por %p169, %p170
      %p173 = scmp.ne.s32.totalorder %s158, %s172
      %p174 = scmp.eq.s32.totalorder %s22, 0
      %p175 = por %p173, %p174
      %s177 = sadd.s32 %s176, 1
      %p180 = scmp.eq.s32.totalorder %s16, 1
      %p181 = scmp.ne.s32.totalorder %s176, %s178
      %p182 = scmp.eq.s32.totalorder %s16, 0
      %p183 = por %p181, %p182
      %p184 = scmp.ne.s32.totalorder %s176, %s178
      %p185 = scmp.eq.s32.totalorder %s21, 1
      %p186 = por %p184, %p185
      %p187 = scmp.ne.s32.totalorder %s178, %s179
      %p188 = scmp.eq.s32.totalorder %s21, 0
      %p189 = por %p187, %p188
      %p190 = scmp.ne.s32.totalorder %s178, %s179
      %p191 = scmp.eq.s32.totalorder %s22, 1
      %p192 = por %p190, %p191
      %p194 = scmp.ne.s32.totalorder %s179, %s193
      %p195 = scmp.eq.s32.totalorder %s22, 0
      %p196 = por %p194, %p195
      %s198 = sadd.s32 %s197, 1
      %p201 = scmp.eq.s32.totalorder %s16, 1
      %p202 = scmp.ne.s32.totalorder %s197, %s199
      %p203 = scmp.eq.s32.totalorder %s16, 0
      %p204 = por %p202, %p203
      %p205 = scmp.ne.s32.totalorder %s197, %s199
      %p206 = scmp.eq.s32.totalorder %s21, 1
      %p207 = por %p205, %p206
      %p208 = scmp.ne.s32.totalorder %s199, %s200
      %p209 = scmp.eq.s32.totalorder %s21, 0
      %p210 = por %p208, %p209
      %p211 = scmp.ne.s32.totalorder %s199, %s200
      %p212 = scmp.eq.s32.totalorder %s22, 1
      %p213 = por %p211, %p212
      %p215 = scmp.ne.s32.totalorder %s200, %s214
      %p216 = scmp.eq.s32.totalorder %s22, 0
      %p217 = por %p215, %p216
      %s218 = ssub.s32 %s16, %s23
      %p219 = scmp.eq.s32.totalorder %s218, 0
      %s221 = sadd.s32 %s220, 1
      %s222 = scalar_select %p219, %s220, %s221
      %p225 = pneg %p219
      %p226 = scmp.eq.s32.totalorder %s16, 1
      %p227 = por %p225, %p226
      %p228 = scmp.ne.s32.totalorder %s220, %s223
      %p229 = scmp.eq.s32.totalorder %s16, 0
      %p230 = por %p228, %p229
      %p231 = scmp.ne.s32.totalorder %s220, %s223
      %p232 = scmp.eq.s32.totalorder %s21, 1
      %p233 = por %p231, %p232
      %p234 = scmp.ne.s32.totalorder %s223, %s224
      %p235 = scmp.eq.s32.totalorder %s21, 0
      %p236 = por %p234, %p235
      %p237 = scmp.ne.s32.totalorder %s223, %s224
      %p238 = scmp.eq.s32.totalorder %s22, 1
      %p239 = por %p237, %p238
      %p241 = scmp.ne.s32.totalorder %s224, %s240
      %p242 = scmp.eq.s32.totalorder %s22, 0
      %p243 = por %p241, %p242
      %p244 = scmp.le.s32.totalorder 1, %s16
      %p245 = scmp.lt.s32.totalorder %s16, 3
      %p246 = pnand %p244, %p245
      %p247 = pneg %p246
      // Predicated region
      $region9: #{tpu_custom_call.1} parent=5 // pred_check
        _
      $region10: #{tpu_custom_call.1} parent=5 // pred_check_branch
        %249 = sbr.rel (%p246) target = $region12
      $region11: #{tpu_custom_call.1} parent=5 // pred_region
        %s250 = ssub.s32 %s16, 1
        // Predicated region
        $region13: #{tpu_custom_call.1} parent=11 // pred_check
          %p251 = pneg %p63
        $region14: #{tpu_custom_call.1} parent=11 // pred_check_branch
          %253 = sbr.rel (%p251) target = $region16
        $region15: #{tpu_custom_call.1} parent=11 // pred_region
          _
        $region16: #{tpu_custom_call.1} parent=11 // pred_fallthru
          _
        // Predicated region
        $region17: #{tpu_custom_call.1} parent=11 // pred_check
          %p254 = pneg %p84
        $region18: #{tpu_custom_call.1} parent=11 // pred_check_branch
          %256 = sbr.rel (%p254) target = $region20
        $region19: #{tpu_custom_call.1} parent=11 // pred_region
          _
        $region20: #{tpu_custom_call.1} parent=11 // pred_fallthru
          _
        // Predicated region
        $region21: #{tpu_custom_call.1} parent=11 // pred_check
          %p257 = pneg %p105
        $region22: #{tpu_custom_call.1} parent=11 // pred_check_branch
          %259 = sbr.rel (%p257) target = $region24
        $region23: #{tpu_custom_call.1} parent=11 // pred_region
          _
        $region24: #{tpu_custom_call.1} parent=11 // pred_fallthru
          _
        // Predicated region
        $region25: #{tpu_custom_call.1} parent=11 // pred_check
          %p260 = pneg %p126
        $region26: #{tpu_custom_call.1} parent=11 // pred_check_branch
          %262 = sbr.rel (%p260) target = $region28
        $region27: #{tpu_custom_call.1} parent=11 // pred_region
          _
        $region28: #{tpu_custom_call.1} parent=11 // pred_fallthru
          _
        // Predicated region
        $region29: #{tpu_custom_call.1} parent=11 // pred_check
          %p263 = pneg %p147
        $region30: #{tpu_custom_call.1} parent=11 // pred_check_branch
          %265 = sbr.rel (%p263) target = $region32
        $region31: #{tpu_custom_call.1} parent=11 // pred_region
          _
        $region32: #{tpu_custom_call.1} parent=11 // pred_fallthru
          _
        // Predicated region
        $region33: #{tpu_custom_call.1} parent=11 // pred_check
          %p266 = pneg %p168
        $region34: #{tpu_custom_call.1} parent=11 // pred_check_branch
          %268 = sbr.rel (%p266) target = $region36
        $region35: #{tpu_custom_call.1} parent=11 // pred_region
          _
        $region36: #{tpu_custom_call.1} parent=11 // pred_fallthru
          _
        // Predicated region
        $region37: #{tpu_custom_call.1} parent=11 // pred_check
          %p269 = pneg %p189
        $region38: #{tpu_custom_call.1} parent=11 // pred_check_branch
          %271 = sbr.rel (%p269) target = $region40
        $region39: #{tpu_custom_call.1} parent=11 // pred_region
          %s273 = ssub.s32 16, 16
          %274 = vsyncadd [#allocation3], %s273
          %s276 = sshll.u32 %s7, 4
          %s277 = int_to_ptr.vmem [resolvable:$true] %s276
          %279 = dma.vmem_to_smem %s277, 16, [#allocation2], [#allocation3]
        $region40: #{tpu_custom_call.1} parent=11 // pred_fallthru
          _
        // Predicated region
        $region41: #{tpu_custom_call.1} parent=11 // pred_check
          %p280 = pneg %p210
        $region42: #{tpu_custom_call.1} parent=11 // pred_check_branch
          %282 = sbr.rel (%p280) target = $region44
        $region43: #{tpu_custom_call.1} parent=11 // pred_region
          _
        $region44: #{tpu_custom_call.1} parent=11 // pred_fallthru
          _
      $region12: #{tpu_custom_call.1} parent=5 // pred_fallthru
        _
      %p283 = scmp.lt.s32.totalorder %s16, 2
      // Predicated region
      $region45: #{tpu_custom_call.1} parent=5 // pred_check
        %p284 = pneg %p283
      $region46: #{tpu_custom_call.1} parent=5 // pred_check_branch
        %286 = sbr.rel (%p284) target = $region48
      $region47: #{tpu_custom_call.1} parent=5 // pred_region
        // Predicated region
        $region49: #{tpu_custom_call.1} parent=47 // pred_check
          %p287 = pneg %p36
        $region50: #{tpu_custom_call.1} parent=47 // pred_check_branch
          %289 = sbr.rel (%p287) target = $region52
        $region51: #{tpu_custom_call.1} parent=47 // pred_region
          %p290 = scmp.lt.s32.totalorder %s16, 1
          %s291 = scalar_select %p290, %s16, 1
          %s292 = smul.addr %s291, 8
          %s293 = scalar_lea.vmem %s0, %s292
        $region52: #{tpu_custom_call.1} parent=47 // pred_fallthru
          _
      $region48: #{tpu_custom_call.1} parent=5 // pred_fallthru
        _
      %p294 = scmp.le.s32.totalorder 1, %s16
      %p295 = scmp.lt.s32.totalorder %s16, 3
      %p296 = pnand %p294, %p295
      %p297 = pneg %p296
      // Predicated region
      $region53: #{tpu_custom_call.1} parent=5 // pred_check
        _
      $region54: #{tpu_custom_call.1} parent=5 // pred_check_branch
        %299 = sbr.rel (%p296) target = $region56
      $region55: #{tpu_custom_call.1} parent=5 // pred_region
        %s300 = ssub.s32 %s16, 1
        // Predicated region
        $region57: #{tpu_custom_call.1} parent=55 // pred_check
          %p301 = pneg %p189
        $region58: #{tpu_custom_call.1} parent=55 // pred_check_branch
          %303 = sbr.rel (%p301) target = $region60
        $region59: #{tpu_custom_call.1} parent=55 // pred_region
          %304 = dma.done [#allocation3], 16
        $region60: #{tpu_custom_call.1} parent=55 // pred_fallthru
          _
        %305 = sfence
        %p306 = scmp.lt.s32.totalorder %s21, 1
        %s307 = scalar_select %p306, %s21, 1
        %s308 = smul.addr %s307, 8
        %s309 = scalar_lea.vmem %s0, %s308
        %p310 = pneg %p42
        %p311 = pneg %p39
        %p312 = pneg %p63
        %p313 = pneg %p60
        %p314 = pneg %p84
        %p315 = pneg %p81
        %p316 = pneg %p105
        %p317 = pneg %p102
        %p318 = pneg %p126
        %p319 = pneg %p123
        %p320 = pneg %p147
        %p321 = pneg %p144
        %p322 = pneg %p168
        %p323 = pneg %p165
        %p324 = pneg %p189
        %p325 = pneg %p186
        %p326 = pneg %p210
        %p327 = pneg %p207
        %p328 = pneg %p236
        %p329 = pneg %p233
        %p330 = scmp.lt.s32.totalorder %s21, 1
        %s331 = scalar_select %p330, %s21, 1
        %s332 = smul.addr %s331, 8
        %s333 = scalar_lea.vmem %s9, %s332
        %p334 = scmp.lt.s32.totalorder %s21, 1
        %s335 = scalar_select %p334, %s21, 1
        %s336 = smul.addr %s335, 8
        %s337 = scalar_lea.vmem %s0, %s336
        %p338 = scmp.lt.s32.totalorder %s21, 1
        %s339 = scalar_select %p338, %s21, 1
        %s340 = smul.addr %s339, 8
        %s341 = scalar_lea.vmem %s9, %s340
        %v342 = vld [vmem:[%s337] sm:$0xff]
        %v343 = vld [vmem:[%s1] sm:$0x1f]
        %v344 = vld [vmem:[%s2] sm:$0x1]
        %v346 = vlaneseq
        %v347 = vshrl.u32 %v346, 7
        %v348 = vsub.s32 0, %v347
        %v349 = vrot.slane %v344, %v348
        %vm351 = vcmask 39936
        %v353 = vsel %vm351, %v342, 0
        %vm355 = vcmask 1044480
        %v357 = vsel %vm355, %v343, 0
        %359 = vmatprep.subr.mxu0 0.0
        %360 = vmatpush1.msra.mxu0 %v357
        %361 = vmatprep.subr.mxu0 0.0
        %362 = vmatpush1.msra.mxu0 0.0
        %363 = vmatprep.subr.mxu0 0.0
        %364 = vmatpush1.msra.mxu0 0.0
        %365 = vmatprep.subr.mxu0 0.0
        %366 = vmatpush1.msra.mxu0 0.0
        %367 = vmatprep.subr.mxu0 0.0
        %368 = vmatpush1.msra.mxu0 0.0
        %369 = vmatprep.subr.mxu0 0.0
        %370 = vmatpush1.msra.mxu0 0.0
        %371 = vmatprep.subr.mxu0 0.0
        %372 = vmatpush1.msra.mxu0 0.0
        %373 = vmatprep.subr.mxu0 0.0
        %374 = vmatpush1.msra.mxu0 0.0
        %375 = vmatprep.subr.mxu0 0.0
        %376 = vmatpush1.msra.mxu0 0.0
        %377 = vmatprep.subr.mxu0 0.0
        %378 = vmatpush1.msra.mxu0 0.0
        %379 = vmatprep.subr.mxu0 0.0
        %380 = vmatpush1.msra.mxu0 0.0
        %381 = vmatprep.subr.mxu0 0.0
        %382 = vmatpush1.msra.mxu0 0.0
        %383 = vmatprep.subr.mxu0 0.0
        %384 = vmatpush1.msra.mxu0 0.0
        %385 = vmatprep.subr.mxu0 0.0
        %386 = vmatpush1.msra.mxu0 0.0
        %387 = vmatprep.subr.mxu0 0.0
        %388 = vmatpush1.msra.mxu0 0.0
        %389 = vmatprep.subr.mxu0 0.0
        %390 = vmatpush1.msra.mxu0 0.0
        %391 = vmatprep.subr.mxu0 0.0
        %392 = vmatpush1.msra.mxu0 0.0
        %393 = vmatprep.subr.mxu0 0.0
        %394 = vmatpush1.msra.mxu0 0.0
        %395 = vmatprep.subr.mxu0 0.0
        %396 = vmatpush1.msra.mxu0 0.0
        %397 = vmatprep.subr.mxu0 0.0
        %398 = vmatpush1.msra.mxu0 0.0
        %399 = vmatprep.subr.mxu0 0.0
        %400 = vmatpush1.msra.mxu0 0.0
        %401 = vmatprep.subr.mxu0 0.0
        %402 = vmatpush1.msra.mxu0 0.0
        %403 = vmatprep.subr.mxu0 0.0
        %404 = vmatpush1.msra.mxu0 0.0
        %405 = vmatprep.subr.mxu0 0.0
        %406 = vmatpush1.msra.mxu0 0.0
        %407 = vmatprep.subr.mxu0 0.0
        %408 = vmatpush1.msra.mxu0 0.0
        %409 = vmatprep.subr.mxu0 0.0
        %410 = vmatpush1.msra.mxu0 0.0
        %411 = vmatprep.subr.mxu0 0.0
        %412 = vmatpush1.msra.mxu0 0.0
        %413 = vmatprep.subr.mxu0 0.0
        %414 = vmatpush1.msra.mxu0 0.0
        %415 = vmatprep.subr.mxu0 0.0
        %416 = vmatpush1.msra.mxu0 0.0
        %417 = vmatprep.subr.mxu0 0.0
        %418 = vmatpush1.msra.mxu0 0.0
        %419 = vmatprep.subr.mxu0 0.0
        %420 = vmatpush1.msra.mxu0 0.0
        %421 = vmatprep.subr.mxu0 0.0
        %422 = vmatpush1.msra.mxu0 0.0
        %423 = vmatprep.mubr.f32.mxu0 0.0
        %424 = vmatmul.mubr.f32.gmra.mrb[0].mxu0 %v353
        %v425 = vpop.f32.mrb[0].mxu0
        %v426 = vadd.f32 %v349, %v425
        %v427 = vpop.f32.mrb[0].mxu0
        %428 = vdwg.mxu0
        %v429 = vmax.f32 %v426, 0.0
        %v430 = vld [vmem:[%s3] sm:$0xff]
        %v431 = vld [vmem:[%s4] sm:$0x1]
        %v433 = vlaneseq
        %v434 = vshrl.u32 %v433, 7
        %v435 = vsub.s32 0, %v434
        %v436 = vrot.slane %v431, %v435
        %vm438 = vcmask 64512
        %v440 = vsel %vm438, %v429, 0
        %442 = vmatprep.subr.mxu0 0.0
        %443 = vmatpush1.msra.mxu0 %v430
        %444 = vmatprep.subr.mxu0 0.0
        %445 = vmatpush1.msra.mxu0 0.0
        %446 = vmatprep.subr.mxu0 0.0
        %447 = vmatpush1.msra.mxu0 0.0
        %448 = vmatprep.subr.mxu0 0.0
        %449 = vmatpush1.msra.mxu0 0.0
        %450 = vmatprep.subr.mxu0 0.0
        %451 = vmatpush1.msra.mxu0 0.0
        %452 = vmatprep.subr.mxu0 0.0
        %453 = vmatpush1.msra.mxu0 0.0
        %454 = vmatprep.subr.mxu0 0.0
        %455 = vmatpush1.msra.mxu0 0.0
        %456 = vmatprep.subr.mxu0 0.0
        %457 = vmatpush1.msra.mxu0 0.0
        %458 = vmatprep.subr.mxu0 0.0
        %459 = vmatpush1.msra.mxu0 0.0
        %460 = vmatprep.subr.mxu0 0.0
        %461 = vmatpush1.msra.mxu0 0.0
        %462 = vmatprep.subr.mxu0 0.0
        %463 = vmatpush1.msra.mxu0 0.0
        %464 = vmatprep.subr.mxu0 0.0
        %465 = vmatpush1.msra.mxu0 0.0
        %466 = vmatprep.subr.mxu0 0.0
        %467 = vmatpush1.msra.mxu0 0.0
        %468 = vmatprep.subr.mxu0 0.0
        %469 = vmatpush1.msra.mxu0 0.0
        %470 = vmatprep.subr.mxu0 0.0
        %471 = vmatpush1.msra.mxu0 0.0
        %472 = vmatprep.subr.mxu0 0.0
        %473 = vmatpush1.msra.mxu0 0.0
        %474 = vmatprep.subr.mxu0 0.0
        %475 = vmatpush1.msra.mxu0 0.0
        %476 = vmatprep.subr.mxu0 0.0
        %477 = vmatpush1.msra.mxu0 0.0
        %478 = vmatprep.subr.mxu0 0.0
        %479 = vmatpush1.msra.mxu0 0.0
        %480 = vmatprep.subr.mxu0 0.0
        %481 = vmatpush1.msra.mxu0 0.0
        %482 = vmatprep.subr.mxu0 0.0
        %483 = vmatpush1.msra.mxu0 0.0
        %484 = vmatprep.subr.mxu0 0.0
        %485 = vmatpush1.msra.mxu0 0.0
        %486 = vmatprep.subr.mxu0 0.0
        %487 = vmatpush1.msra.mxu0 0.0
        %488 = vmatprep.subr.mxu0 0.0
        %489 = vmatpush1.msra.mxu0 0.0
        %490 = vmatprep.subr.mxu0 0.0
        %491 = vmatpush1.msra.mxu0 0.0
        %492 = vmatprep.subr.mxu0 0.0
        %493 = vmatpush1.msra.mxu0 0.0
        %494 = vmatprep.subr.mxu0 0.0
        %495 = vmatpush1.msra.mxu0 0.0
        %496 = vmatprep.subr.mxu0 0.0
        %497 = vmatpush1.msra.mxu0 0.0
        %498 = vmatprep.subr.mxu0 0.0
        %499 = vmatpush1.msra.mxu0 0.0
        %500 = vmatprep.subr.mxu0 0.0
        %501 = vmatpush1.msra.mxu0 0.0
        %502 = vmatprep.subr.mxu0 0.0
        %503 = vmatpush1.msra.mxu0 0.0
        %504 = vmatprep.subr.mxu0 0.0
        %505 = vmatpush1.msra.mxu0 0.0
        %506 = vmatprep.mubr.f32.mxu0 0.0
        %507 = vmatmul.mubr.f32.gmra.mrb[0].mxu0 %v440
        %v508 = vpop.f32.mrb[0].mxu0
        %v509 = vadd.f32 %v436, %v508
        %v510 = vpop.f32.mrb[0].mxu0
        %511 = vdwg.mxu0
        %v512 = vmax.f32 %v509, 0.0
        %v513 = vld [vmem:[%s5] sm:$0xff]
        %v514 = vld [vmem:[%s6] sm:$0x1]
        %v516 = vlaneseq
        %v517 = vshrl.u32 %v516, 7
        %v518 = vsub.s32 0, %v517
        %v519 = vrot.slane %v514, %v518
        %v522 = vsel %vm438, %v512, 0
        %524 = vmatprep.subr.mxu0 0.0
        %525 = vmatpush1.msra.mxu0 %v513
        %526 = vmatprep.subr.mxu0 0.0
        %527 = vmatpush1.msra.mxu0 0.0
        %528 = vmatprep.subr.mxu0 0.0
        %529 = vmatpush1.msra.mxu0 0.0
        %530 = vmatprep.subr.mxu0 0.0
        %531 = vmatpush1.msra.mxu0 0.0
        %532 = vmatprep.subr.mxu0 0.0
        %533 = vmatpush1.msra.mxu0 0.0
        %534 = vmatprep.subr.mxu0 0.0
        %535 = vmatpush1.msra.mxu0 0.0
        %536 = vmatprep.subr.mxu0 0.0
        %537 = vmatpush1.msra.mxu0 0.0
        %538 = vmatprep.subr.mxu0 0.0
        %539 = vmatpush1.msra.mxu0 0.0
        %540 = vmatprep.subr.mxu0 0.0
        %541 = vmatpush1.msra.mxu0 0.0
        %542 = vmatprep.subr.mxu0 0.0
        %543 = vmatpush1.msra.mxu0 0.0
        %544 = vmatprep.subr.mxu0 0.0
        %545 = vmatpush1.msra.mxu0 0.0
        %546 = vmatprep.subr.mxu0 0.0
        %547 = vmatpush1.msra.mxu0 0.0
        %548 = vmatprep.subr.mxu0 0.0
        %549 = vmatpush1.msra.mxu0 0.0
        %550 = vmatprep.subr.mxu0 0.0
        %551 = vmatpush1.msra.mxu0 0.0
        %552 = vmatprep.subr.mxu0 0.0
        %553 = vmatpush1.msra.mxu0 0.0
        %554 = vmatprep.subr.mxu0 0.0
        %555 = vmatpush1.msra.mxu0 0.0
        %556 = vmatprep.subr.mxu0 0.0
        %557 = vmatpush1.msra.mxu0 0.0
        %558 = vmatprep.subr.mxu0 0.0
        %559 = vmatpush1.msra.mxu0 0.0
        %560 = vmatprep.subr.mxu0 0.0
        %561 = vmatpush1.msra.mxu0 0.0
        %562 = vmatprep.subr.mxu0 0.0
        %563 = vmatpush1.msra.mxu0 0.0
        %564 = vmatprep.subr.mxu0 0.0
        %565 = vmatpush1.msra.mxu0 0.0
        %566 = vmatprep.subr.mxu0 0.0
        %567 = vmatpush1.msra.mxu0 0.0
        %568 = vmatprep.subr.mxu0 0.0
        %569 = vmatpush1.msra.mxu0 0.0
        %570 = vmatprep.subr.mxu0 0.0
        %571 = vmatpush1.msra.mxu0 0.0
        %572 = vmatprep.subr.mxu0 0.0
        %573 = vmatpush1.msra.mxu0 0.0
        %574 = vmatprep.subr.mxu0 0.0
        %575 = vmatpush1.msra.mxu0 0.0
        %576 = vmatprep.subr.mxu0 0.0
        %577 = vmatpush1.msra.mxu0 0.0
        %578 = vmatprep.subr.mxu0 0.0
        %579 = vmatpush1.msra.mxu0 0.0
        %580 = vmatprep.subr.mxu0 0.0
        %581 = vmatpush1.msra.mxu0 0.0
        %582 = vmatprep.subr.mxu0 0.0
        %583 = vmatpush1.msra.mxu0 0.0
        %584 = vmatprep.subr.mxu0 0.0
        %585 = vmatpush1.msra.mxu0 0.0
        %586 = vmatprep.subr.mxu0 0.0
        %587 = vmatpush1.msra.mxu0 0.0
        %588 = vmatprep.mubr.f32.mxu0 0.0
        %589 = vmatmul.mubr.f32.gmra.mrb[0].mxu0 %v522
        %v590 = vpop.f32.mrb[0].mxu0
        %v591 = vadd.f32 %v519, %v590
        %v592 = vpop.f32.mrb[0].mxu0
        %593 = vdwg.mxu0
        %v594 = vsub.f32 %v591, -5.0
        %v595 = vmul.f32 %v594, 0.01
        %v596 = vlaneseq
        %v597 = vand.u32 %v596, 127
        %v598 = vcvt.s32.f32 %v597
        %v599 = vadd.f32 %v598, 0.5
        %v600 = vmul.f32 %v599, 0.01
        %vm601 = vcmp.lt.s32.totalorder %v597, 100
        %v602 = vsel %vm601, 1, 0
        %v603 = vcvt.s32.f32 %v602
        %v604 = vlaneseq
        %v605 = vshrl.u32 %v604, 7
        %v606 = vsub.s32 0, %v605
        %v607 = vrot.slane %v594, %v606
        %609 = vbcast.lane.b32.xlu0 %v607, 256
        %v610 = vpop.permute.xlu0 %609
        %v611 = vlaneseq
        %v612 = vshrl.u32 %v611, 7
        %v613 = vsub.s32 1, %v612
        %v614 = vrot.slane %v594, %v613
        %616 = vbcast.lane.b32.xlu0 %v614, 256
        %v617 = vpop.permute.xlu0 %616
        %v618 = vlaneseq
        %v619 = vshrl.u32 %v618, 7
        %v620 = vsub.s32 2, %v619
        %v621 = vrot.slane %v594, %v620
        %623 = vbcast.lane.b32.xlu0 %v621, 256
        %v624 = vpop.permute.xlu0 %623
        %v625 = vlaneseq
        %v626 = vshrl.u32 %v625, 7
        %v627 = vsub.s32 3, %v626
        %v628 = vrot.slane %v594, %v627
        %630 = vbcast.lane.b32.xlu0 %v628, 256
        %v631 = vpop.permute.xlu0 %630
        %v632 = vlaneseq
        %v633 = vshrl.u32 %v632, 7
        %v634 = vsub.s32 4, %v633
        %v635 = vrot.slane %v594, %v634
        %637 = vbcast.lane.b32.xlu0 %v635, 256
        %v638 = vpop.permute.xlu0 %637
        %v639 = vlaneseq
        %v640 = vshrl.u32 %v639, 7
        %v641 = vsub.s32 5, %v640
        %v642 = vrot.slane %v594, %v641
        %644 = vbcast.lane.b32.xlu0 %v642, 256
        %v645 = vpop.permute.xlu0 %644
        %v646 = vlaneseq
        %v647 = vshrl.u32 %v646, 7
        %v648 = vsub.s32 6, %v647
        %v649 = vrot.slane %v594, %v648
        %651 = vbcast.lane.b32.xlu0 %v649, 256
        %v652 = vpop.permute.xlu0 %651
        %v653 = vlaneseq
        %v654 = vshrl.u32 %v653, 7
        %v655 = vsub.s32 7, %v654
        %v656 = vrot.slane %v594, %v655
        %658 = vbcast.lane.b32.xlu0 %v656, 256
        %v659 = vpop.permute.xlu0 %658
        %v660 = vmul.f32 %v600, %v610
        %v661 = vmul.f32 %v600, %v617
        %v662 = vmul.f32 %v600, %v624
        %v663 = vmul.f32 %v600, %v631
        %v664 = vmul.f32 %v600, %v638
        %v665 = vmul.f32 %v600, %v645
        %v666 = vmul.f32 %v600, %v652
        %v667 = vmul.f32 %v600, %v659
        %v668 = vadd.f32 %v660, -5.0
        %v669 = vadd.f32 %v661, -5.0
        %v670 = vadd.f32 %v662, -5.0
        %v671 = vadd.f32 %v663, -5.0
        %v672 = vadd.f32 %v664, -5.0
        %v673 = vadd.f32 %v665, -5.0
        %v674 = vadd.f32 %v666, -5.0
        %v675 = vadd.f32 %v667, -5.0
        %s676 = sld [smem:[#allocation2]]
        %s677 = sld [smem:[#allocation2 + $0x4]]
        %s678 = sld [smem:[#allocation2 + $0x8]]
        %v679 = vstv %s676
        %v680 = vmul.f32 %v668, %v679
        %v681 = vmul.f32 %v669, %v679
        %v682 = vmul.f32 %v670, %v679
        %v683 = vmul.f32 %v671, %v679
        %v684 = vmul.f32 %v672, %v679
        %v685 = vmul.f32 %v673, %v679
        %v686 = vmul.f32 %v674, %v679
        %v687 = vmul.f32 %v675, %v679
        %v688 = vstv %s677
        %v689 = vadd.f32 %v680, %v688
        %v690 = vadd.f32 %v681, %v688
        %v691 = vadd.f32 %v682, %v688
        %v692 = vadd.f32 %v683, %v688
        %v693 = vadd.f32 %v684, %v688
        %v694 = vadd.f32 %v685, %v688
        %v695 = vadd.f32 %v686, %v688
        %v696 = vadd.f32 %v687, %v688
        %v697 = vtanh.pop %v689
        %v698 = vtanh.pop %v690
        %v699 = vtanh.pop %v691
        %v700 = vtanh.pop %v692
        %v701 = vtanh.pop %v693
        %v702 = vtanh.pop %v694
        %v703 = vtanh.pop %v695
        %v704 = vtanh.pop %v696
        %v705 = vstv %s678
        %v706 = vmul.f32 %v705, %v697
        %v707 = vmul.f32 %v705, %v698
        %v708 = vmul.f32 %v705, %v699
        %v709 = vmul.f32 %v705, %v700
        %v710 = vmul.f32 %v705, %v701
        %v711 = vmul.f32 %v705, %v702
        %v712 = vmul.f32 %v705, %v703
        %v713 = vmul.f32 %v705, %v704
        %s714 = sld [smem:[#allocation2 + $0x1]]
        %s715 = sld [smem:[#allocation2 + $0x5]]
        %s716 = sld [smem:[#allocation2 + $0x9]]
        %v717 = vstv %s714
        %v718 = vmul.f32 %v668, %v717
        %v719 = vmul.f32 %v669, %v717
        %v720 = vmul.f32 %v670, %v717
        %v721 = vmul.f32 %v671, %v717
        %v722 = vmul.f32 %v672, %v717
        %v723 = vmul.f32 %v673, %v717
        %v724 = vmul.f32 %v674, %v717
        %v725 = vmul.f32 %v675, %v717
        %v726 = vstv %s715
        %v727 = vadd.f32 %v718, %v726
        %v728 = vadd.f32 %v719, %v726
        %v729 = vadd.f32 %v720, %v726
        %v730 = vadd.f32 %v721, %v726
        %v731 = vadd.f32 %v722, %v726
        %v732 = vadd.f32 %v723, %v726
        %v733 = vadd.f32 %v724, %v726
        %v734 = vadd.f32 %v725, %v726
        %v735 = vtanh.pop %v727
        %v736 = vtanh.pop %v728
        %v737 = vtanh.pop %v729
        %v738 = vtanh.pop %v730
        %v739 = vtanh.pop %v731
        %v740 = vtanh.pop %v732
        %v741 = vtanh.pop %v733
        %v742 = vtanh.pop %v734
        %v743 = vstv %s716
        %v744 = vmul.f32 %v743, %v735
        %v745 = vmul.f32 %v743, %v736
        %v746 = vmul.f32 %v743, %v737
        %v747 = vmul.f32 %v743, %v738
        %v748 = vmul.f32 %v743, %v739
        %v749 = vmul.f32 %v743, %v740
        %v750 = vmul.f32 %v743, %v741
        %v751 = vmul.f32 %v743, %v742
        %v752 = vadd.f32 %v706, %v744
        %v753 = vadd.f32 %v707, %v745
        %v754 = vadd.f32 %v708, %v746
        %v755 = vadd.f32 %v709, %v747
        %v756 = vadd.f32 %v710, %v748
        %v757 = vadd.f32 %v711, %v749
        %v758 = vadd.f32 %v712, %v750
        %v759 = vadd.f32 %v713, %v751
        %s760 = sld [smem:[#allocation2 + $0x2]]
        %s761 = sld [smem:[#allocation2 + $0x6]]
        %s762 = sld [smem:[#allocation2 + $0xa]]
        %v763 = vstv %s760
        %v764 = vmul.f32 %v668, %v763
        %v765 = vmul.f32 %v669, %v763
        %v766 = vmul.f32 %v670, %v763
        %v767 = vmul.f32 %v671, %v763
        %v768 = vmul.f32 %v672, %v763
        %v769 = vmul.f32 %v673, %v763
        %v770 = vmul.f32 %v674, %v763
        %v771 = vmul.f32 %v675, %v763
        %v772 = vstv %s761
        %v773 = vadd.f32 %v764, %v772
        %v774 = vadd.f32 %v765, %v772
        %v775 = vadd.f32 %v766, %v772
        %v776 = vadd.f32 %v767, %v772
        %v777 = vadd.f32 %v768, %v772
        %v778 = vadd.f32 %v769, %v772
        %v779 = vadd.f32 %v770, %v772
        %v780 = vadd.f32 %v771, %v772
        %v781 = vtanh.pop %v773
        %v782 = vtanh.pop %v774
        %v783 = vtanh.pop %v775
        %v784 = vtanh.pop %v776
        %v785 = vtanh.pop %v777
        %v786 = vtanh.pop %v778
        %v787 = vtanh.pop %v779
        %v788 = vtanh.pop %v780
        %v789 = vstv %s762
        %v790 = vmul.f32 %v789, %v781
        %v791 = vmul.f32 %v789, %v782
        %v792 = vmul.f32 %v789, %v783
        %v793 = vmul.f32 %v789, %v784
        %v794 = vmul.f32 %v789, %v785
        %v795 = vmul.f32 %v789, %v786
        %v796 = vmul.f32 %v789, %v787
        %v797 = vmul.f32 %v789, %v788
        %v798 = vadd.f32 %v752, %v790
        %v799 = vadd.f32 %v753, %v791
        %v800 = vadd.f32 %v754, %v792
        %v801 = vadd.f32 %v755, %v793
        %v802 = vadd.f32 %v756, %v794
        %v803 = vadd.f32 %v757, %v795
        %v804 = vadd.f32 %v758, %v796
        %v805 = vadd.f32 %v759, %v797
        %s806 = sld [smem:[#allocation2 + $0x3]]
        %s807 = sld [smem:[#allocation2 + $0x7]]
        %s808 = sld [smem:[#allocation2 + $0xb]]
        %v809 = vstv %s806
        %v810 = vmul.f32 %v668, %v809
        %v811 = vmul.f32 %v669, %v809
        %v812 = vmul.f32 %v670, %v809
        %v813 = vmul.f32 %v671, %v809
        %v814 = vmul.f32 %v672, %v809
        %v815 = vmul.f32 %v673, %v809
        %v816 = vmul.f32 %v674, %v809
        %v817 = vmul.f32 %v675, %v809
        %v818 = vstv %s807
        %v819 = vadd.f32 %v810, %v818
        %v820 = vadd.f32 %v811, %v818
        %v821 = vadd.f32 %v812, %v818
        %v822 = vadd.f32 %v813, %v818
        %v823 = vadd.f32 %v814, %v818
        %v824 = vadd.f32 %v815, %v818
        %v825 = vadd.f32 %v816, %v818
        %v826 = vadd.f32 %v817, %v818
        %v827 = vtanh.pop %v819
        %v828 = vtanh.pop %v820
        %v829 = vtanh.pop %v821
        %v830 = vtanh.pop %v822
        %v831 = vtanh.pop %v823
        %v832 = vtanh.pop %v824
        %v833 = vtanh.pop %v825
        %v834 = vtanh.pop %v826
        %v835 = vstv %s808
        %v836 = vmul.f32 %v835, %v827
        %v837 = vmul.f32 %v835, %v828
        %v838 = vmul.f32 %v835, %v829
        %v839 = vmul.f32 %v835, %v830
        %v840 = vmul.f32 %v835, %v831
        %v841 = vmul.f32 %v835, %v832
        %v842 = vmul.f32 %v835, %v833
        %v843 = vmul.f32 %v835, %v834
        %v844 = vadd.f32 %v798, %v836
        %v845 = vadd.f32 %v799, %v837
        %v846 = vadd.f32 %v800, %v838
        %v847 = vadd.f32 %v801, %v839
        %v848 = vadd.f32 %v802, %v840
        %v849 = vadd.f32 %v803, %v841
        %v850 = vadd.f32 %v804, %v842
        %v851 = vadd.f32 %v805, %v843
        %s852 = sld [smem:[#allocation2 + $0xc]]
        %v853 = vstv %s852
        %v854 = vadd.f32 %v844, %v853
        %v855 = vadd.f32 %v845, %v853
        %v856 = vadd.f32 %v846, %v853
        %v857 = vadd.f32 %v847, %v853
        %v858 = vadd.f32 %v848, %v853
        %v859 = vadd.f32 %v849, %v853
        %v860 = vadd.f32 %v850, %v853
        %v861 = vadd.f32 %v851, %v853
        %v862 = vand.u32 2147483647, %v854
        %v863 = vand.u32 2147483647, %v855
        %v864 = vand.u32 2147483647, %v856
        %v865 = vand.u32 2147483647, %v857
        %v866 = vand.u32 2147483647, %v858
        %v867 = vand.u32 2147483647, %v859
        %v868 = vand.u32 2147483647, %v860
        %v869 = vand.u32 2147483647, %v861
        %v870 = vsub.f32 0.0, %v862
        %v871 = vsub.f32 0.0, %v863
        %v872 = vsub.f32 0.0, %v864
        %v873 = vsub.f32 0.0, %v865
        %v874 = vsub.f32 0.0, %v866
        %v875 = vsub.f32 0.0, %v867
        %v876 = vsub.f32 0.0, %v868
        %v877 = vsub.f32 0.0, %v869
        %v878 = vmul.f32 %v870, 1.442695
        %v879 = vpow.pop %v878
        %v880 = vmul.f32 %v871, 1.442695
        %v881 = vpow.pop %v880
        %v882 = vmul.f32 %v872, 1.442695
        %v883 = vpow.pop %v882
        %v884 = vmul.f32 %v873, 1.442695
        %v885 = vpow.pop %v884
        %v886 = vmul.f32 %v874, 1.442695
        %v887 = vpow.pop %v886
        %v888 = vmul.f32 %v875, 1.442695
        %v889 = vpow.pop %v888
        %v890 = vmul.f32 %v876, 1.442695
        %v891 = vpow.pop %v890
        %v892 = vmul.f32 %v877, 1.442695
        %v893 = vpow.pop %v892
        %v894 = vmax.f32 %v854, 0.0
        %v895 = vmax.f32 %v855, 0.0
        %v896 = vmax.f32 %v856, 0.0
        %v897 = vmax.f32 %v857, 0.0
        %v898 = vmax.f32 %v858, 0.0
        %v899 = vmax.f32 %v859, 0.0
        %v900 = vmax.f32 %v860, 0.0
        %v901 = vmax.f32 %v861, 0.0
        %v902 = vadd.f32 %v879, 1.0
        %v903 = vlog2.pop %v902
        %v904 = vmul.f32 %v903, 0.6931472
        %v905 = vmul.f32 -0.5, %v879
        %v906 = vadd.f32 %v905, 1.0
        %v907 = vmul.f32 %v906, %v879
        %v908 = vand.u32 2147483647, %v879
        %vm909 = vcmp.lt.f32.partialorder %v908, 0.0004427343
        %v910 = vsel %vm909, %v907, %v904
        %v911 = vadd.f32 %v881, 1.0
        %v912 = vlog2.pop %v911
        %v913 = vmul.f32 %v912, 0.6931472
        %v914 = vmul.f32 -0.5, %v881
        %v915 = vadd.f32 %v914, 1.0
        %v916 = vmul.f32 %v915, %v881
        %v917 = vand.u32 2147483647, %v881
        %vm918 = vcmp.lt.f32.partialorder %v917, 0.0004427343
        %v919 = vsel %vm918, %v916, %v913
        %v920 = vadd.f32 %v883, 1.0
        %v921 = vlog2.pop %v920
        %v922 = vmul.f32 %v921, 0.6931472
        %v923 = vmul.f32 -0.5, %v883
        %v924 = vadd.f32 %v923, 1.0
        %v925 = vmul.f32 %v924, %v883
        %v926 = vand.u32 2147483647, %v883
        %vm927 = vcmp.lt.f32.partialorder %v926, 0.0004427343
        %v928 = vsel %vm927, %v925, %v922
        %v929 = vadd.f32 %v885, 1.0
        %v930 = vlog2.pop %v929
        %v931 = vmul.f32 %v930, 0.6931472
        %v932 = vmul.f32 -0.5, %v885
        %v933 = vadd.f32 %v932, 1.0
        %v934 = vmul.f32 %v933, %v885
        %v935 = vand.u32 2147483647, %v885
        %vm936 = vcmp.lt.f32.partialorder %v935, 0.0004427343
        %v937 = vsel %vm936, %v934, %v931
        %v938 = vadd.f32 %v887, 1.0
        %v939 = vlog2.pop %v938
        %v940 = vmul.f32 %v939, 0.6931472
        %v941 = vmul.f32 -0.5, %v887
        %v942 = vadd.f32 %v941, 1.0
        %v943 = vmul.f32 %v942, %v887
        %v944 = vand.u32 2147483647, %v887
        %vm945 = vcmp.lt.f32.partialorder %v944, 0.0004427343
        %v946 = vsel %vm945, %v943, %v940
        %v947 = vadd.f32 %v889, 1.0
        %v948 = vlog2.pop %v947
        %v949 = vmul.f32 %v948, 0.6931472
        %v950 = vmul.f32 -0.5, %v889
        %v951 = vadd.f32 %v950, 1.0
        %v952 = vmul.f32 %v951, %v889
        %v953 = vand.u32 2147483647, %v889
        %vm954 = vcmp.lt.f32.partialorder %v953, 0.0004427343
        %v955 = vsel %vm954, %v952, %v949
        %v956 = vadd.f32 %v891, 1.0
        %v957 = vlog2.pop %v956
        %v958 = vmul.f32 %v957, 0.6931472
        %v959 = vmul.f32 -0.5, %v891
        %v960 = vadd.f32 %v959, 1.0
        %v961 = vmul.f32 %v960, %v891
        %v962 = vand.u32 2147483647, %v891
        %vm963 = vcmp.lt.f32.partialorder %v962, 0.0004427343
        %v964 = vsel %vm963, %v961, %v958
        %v965 = vadd.f32 %v893, 1.0
        %v966 = vlog2.pop %v965
        %v967 = vmul.f32 %v966, 0.6931472
        %v968 = vmul.f32 -0.5, %v893
        %v969 = vadd.f32 %v968, 1.0
        %v970 = vmul.f32 %v969, %v893
        %v971 = vand.u32 2147483647, %v893
        %vm972 = vcmp.lt.f32.partialorder %v971, 0.0004427343
        %v973 = vsel %vm972, %v970, %v967
        %v974 = vadd.f32 %v894, %v910
        %v975 = vadd.f32 %v895, %v919
        %v976 = vadd.f32 %v896, %v928
        %v977 = vadd.f32 %v897, %v937
        %v978 = vadd.f32 %v898, %v946
        %v979 = vadd.f32 %v899, %v955
        %v980 = vadd.f32 %v900, %v964
        %v981 = vadd.f32 %v901, %v973
        %v982 = vmul.f32 %v974, %v603
        %v983 = vmul.f32 %v975, %v603
        %v984 = vmul.f32 %v976, %v603
        %v985 = vmul.f32 %v977, %v603
        %v986 = vmul.f32 %v978, %v603
        %v987 = vmul.f32 %v979, %v603
        %v988 = vmul.f32 %v980, %v603
        %v989 = vmul.f32 %v981, %v603
        %990 = vadd.xlane.f32.xlu0 %v982
        %v991 = vpop.xlane.xlu0 %990
        %992 = vadd.xlane.f32.xlu0 %v983
        %v993 = vpop.xlane.xlu0 %992
        %994 = vadd.xlane.f32.xlu0 %v984
        %v995 = vpop.xlane.xlu0 %994
        %996 = vadd.xlane.f32.xlu0 %v985
        %v997 = vpop.xlane.xlu0 %996
        %998 = vadd.xlane.f32.xlu0 %v986
        %v999 = vpop.xlane.xlu0 %998
        %1000 = vadd.xlane.f32.xlu0 %v987
        %v1001 = vpop.xlane.xlu0 %1000
        %1002 = vadd.xlane.f32.xlu0 %v988
        %v1003 = vpop.xlane.xlu0 %1002
        %1004 = vadd.xlane.f32.xlu0 %v989
        %v1005 = vpop.xlane.xlu0 %1004
        %v1007 = vlaneseq
        %v1008 = vshrl.u32 %v1007, 7
        %v1009 = vsub.s32 0, %v1008
        %v1010 = vrot.slane %v595, %v1009
        %1012 = vbcast.lane.b32.xlu0 %v1010, 256
        %v1013 = vpop.permute.xlu0 %1012
        %v1014 = vlaneseq
        %v1015 = vshrl.u32 %v1014, 7
        %v1016 = vsub.s32 1, %v1015
        %v1017 = vrot.slane %v595, %v1016
        %1019 = vbcast.lane.b32.xlu0 %v1017, 256
        %v1020 = vpop.permute.xlu0 %1019
        %v1021 = vlaneseq
        %v1022 = vshrl.u32 %v1021, 7
        %v1023 = vsub.s32 2, %v1022
        %v1024 = vrot.slane %v595, %v1023
        %1026 = vbcast.lane.b32.xlu0 %v1024, 256
        %v1027 = vpop.permute.xlu0 %1026
        %v1028 = vlaneseq
        %v1029 = vshrl.u32 %v1028, 7
        %v1030 = vsub.s32 3, %v1029
        %v1031 = vrot.slane %v595, %v1030
        %1033 = vbcast.lane.b32.xlu0 %v1031, 256
        %v1034 = vpop.permute.xlu0 %1033
        %v1035 = vlaneseq
        %v1036 = vshrl.u32 %v1035, 7
        %v1037 = vsub.s32 4, %v1036
        %v1038 = vrot.slane %v595, %v1037
        %1040 = vbcast.lane.b32.xlu0 %v1038, 256
        %v1041 = vpop.permute.xlu0 %1040
        %v1042 = vlaneseq
        %v1043 = vshrl.u32 %v1042, 7
        %v1044 = vsub.s32 5, %v1043
        %v1045 = vrot.slane %v595, %v1044
        %1047 = vbcast.lane.b32.xlu0 %v1045, 256
        %v1048 = vpop.permute.xlu0 %1047
        %v1049 = vlaneseq
        %v1050 = vshrl.u32 %v1049, 7
        %v1051 = vsub.s32 6, %v1050
        %v1052 = vrot.slane %v595, %v1051
        %1054 = vbcast.lane.b32.xlu0 %v1052, 256
        %v1055 = vpop.permute.xlu0 %1054
        %v1056 = vlaneseq
        %v1057 = vshrl.u32 %v1056, 7
        %v1058 = vsub.s32 7, %v1057
        %v1059 = vrot.slane %v595, %v1058
        %1061 = vbcast.lane.b32.xlu0 %v1059, 256
        %v1062 = vpop.permute.xlu0 %1061
        %v1071 = vmul.f32 %v991, %v1013
        %v1072 = vmul.f32 %v993, %v1020
        %v1073 = vmul.f32 %v995, %v1027
        %v1074 = vmul.f32 %v997, %v1034
        %v1075 = vmul.f32 %v999, %v1041
        %v1076 = vmul.f32 %v1001, %v1048
        %v1077 = vmul.f32 %v1003, %v1055
        %v1078 = vmul.f32 %v1005, %v1062
        %v1079 = vld [vmem:[%s8] sm:$0x1]
        %v1081 = vlaneseq
        %v1082 = vshrl.u32 %v1081, 7
        %v1083 = vsub.s32 0, %v1082
        %v1084 = vrot.slane %v1079, %v1083
        %1086 = vbcast.lane.b32.xlu0 %v1084, 256
        %v1087 = vpop.permute.xlu0 %1086
        %v1089 = vadd.f32 %v1071, %v1087
        %v1090 = vadd.f32 %v1072, %v1087
        %v1091 = vadd.f32 %v1073, %v1087
        %v1092 = vadd.f32 %v1074, %v1087
        %v1093 = vadd.f32 %v1075, %v1087
        %v1094 = vadd.f32 %v1076, %v1087
        %v1095 = vadd.f32 %v1077, %v1087
        %v1096 = vadd.f32 %v1078, %v1087
        %v1097 = vsub.f32 0.0, %v1089
        %v1098 = vsub.f32 0.0, %v1090
        %v1099 = vsub.f32 0.0, %v1091
        %v1100 = vsub.f32 0.0, %v1092
        %v1101 = vsub.f32 0.0, %v1093
        %v1102 = vsub.f32 0.0, %v1094
        %v1103 = vsub.f32 0.0, %v1095
        %v1104 = vsub.f32 0.0, %v1096
        %v1105 = vmul.f32 %v1097, 1.442695
        %v1106 = vpow.pop %v1105
        %v1107 = vmul.f32 %v1098, 1.442695
        %v1108 = vpow.pop %v1107
        %v1109 = vmul.f32 %v1099, 1.442695
        %v1110 = vpow.pop %v1109
        %v1111 = vmul.f32 %v1100, 1.442695
        %v1112 = vpow.pop %v1111
        %v1113 = vmul.f32 %v1101, 1.442695
        %v1114 = vpow.pop %v1113
        %v1115 = vmul.f32 %v1102, 1.442695
        %v1116 = vpow.pop %v1115
        %v1117 = vmul.f32 %v1103, 1.442695
        %v1118 = vpow.pop %v1117
        %v1119 = vmul.f32 %v1104, 1.442695
        %v1120 = vpow.pop %v1119
        %v1121 = vadd.f32 %v1106, 1.0
        %v1122 = vadd.f32 %v1108, 1.0
        %v1123 = vadd.f32 %v1110, 1.0
        %v1124 = vadd.f32 %v1112, 1.0
        %v1125 = vadd.f32 %v1114, 1.0
        %v1126 = vadd.f32 %v1116, 1.0
        %v1127 = vadd.f32 %v1118, 1.0
        %v1128 = vadd.f32 %v1120, 1.0
        %v1129 = vrcp.pop %v1121
        %v1130 = vmul.f32 1.0, %v1129
        %v1131 = vrcp.pop %v1122
        %v1132 = vmul.f32 1.0, %v1131
        %v1133 = vrcp.pop %v1123
        %v1134 = vmul.f32 1.0, %v1133
        %v1135 = vrcp.pop %v1124
        %v1136 = vmul.f32 1.0, %v1135
        %v1137 = vrcp.pop %v1125
        %v1138 = vmul.f32 1.0, %v1137
        %v1139 = vrcp.pop %v1126
        %v1140 = vmul.f32 1.0, %v1139
        %v1141 = vrcp.pop %v1127
        %v1142 = vmul.f32 1.0, %v1141
        %v1143 = vrcp.pop %v1128
        %v1144 = vmul.f32 1.0, %v1143
        %1153 = vset.pattern.permute.xlu0 0
        %1154 = vperm.xlu0 %1153, %v1130
        %v1155 = vpop.permute.xlu0 %1154
        %1156 = vset.pattern.permute.xlu0 0
        %1157 = vperm.xlu0 %1156, %v1132
        %v1158 = vpop.permute.xlu0 %1157
        %1159 = vset.pattern.permute.xlu0 0
        %1160 = vperm.xlu0 %1159, %v1134
        %v1161 = vpop.permute.xlu0 %1160
        %1162 = vset.pattern.permute.xlu0 0
        %1163 = vperm.xlu0 %1162, %v1136
        %v1164 = vpop.permute.xlu0 %1163
        %1165 = vset.pattern.permute.xlu0 0
        %1166 = vperm.xlu0 %1165, %v1138
        %v1167 = vpop.permute.xlu0 %1166
        %1168 = vset.pattern.permute.xlu0 0
        %1169 = vperm.xlu0 %1168, %v1140
        %v1170 = vpop.permute.xlu0 %1169
        %1171 = vset.pattern.permute.xlu0 0
        %1172 = vperm.xlu0 %1171, %v1142
        %v1173 = vpop.permute.xlu0 %1172
        %1174 = vset.pattern.permute.xlu0 0
        %1175 = vperm.xlu0 %1174, %v1144
        %v1176 = vpop.permute.xlu0 %1175
        %v1177 = vlaneseq
        %v1178 = vshrl.u32 %v1177, 7
        %v1179 = vsub.s32 %v597, %v1178
        %v1180 = vrot.slane %v1155, %v1179
        %v1181 = vlaneseq
        %v1182 = vshrl.u32 %v1181, 7
        %v1183 = vsub.s32 %v597, %v1182
        %v1184 = vrot.slane %v1158, %v1183
        %v1185 = vlaneseq
        %v1186 = vshrl.u32 %v1185, 7
        %v1187 = vsub.s32 %v597, %v1186
        %v1188 = vrot.slane %v1161, %v1187
        %v1189 = vlaneseq
        %v1190 = vshrl.u32 %v1189, 7
        %v1191 = vsub.s32 %v597, %v1190
        %v1192 = vrot.slane %v1164, %v1191
        %v1193 = vlaneseq
        %v1194 = vshrl.u32 %v1193, 7
        %v1195 = vsub.s32 %v597, %v1194
        %v1196 = vrot.slane %v1167, %v1195
        %v1197 = vlaneseq
        %v1198 = vshrl.u32 %v1197, 7
        %v1199 = vsub.s32 %v597, %v1198
        %v1200 = vrot.slane %v1170, %v1199
        %v1201 = vlaneseq
        %v1202 = vshrl.u32 %v1201, 7
        %v1203 = vsub.s32 %v597, %v1202
        %v1204 = vrot.slane %v1173, %v1203
        %v1205 = vlaneseq
        %v1206 = vshrl.u32 %v1205, 7
        %v1207 = vsub.s32 %v597, %v1206
        %v1208 = vrot.slane %v1176, %v1207
        %vm1209 = vcmask 1041409
        %v1210 = vsel %vm1209, %v1184, %v1180
        %vm1211 = vcmask 1042434
        %v1212 = vsel %vm1211, %v1188, %v1210
        %vm1213 = vcmask 1043459
        %v1214 = vsel %vm1213, %v1192, %v1212
        %vm1215 = vcmask 1044484
        %v1216 = vsel %vm1215, %v1196, %v1214
        %vm1217 = vcmask 1045509
        %v1218 = vsel %vm1217, %v1200, %v1216
        %vm1219 = vcmask 1046534
        %v1220 = vsel %vm1219, %v1204, %v1218
        %vm1221 = vcmask 1047559
        %v1222 = vsel %vm1221, %v1208, %v1220
        %1224 = vst.msk [vmem:[%s341] sm:$0xff] %vm438, %v1222
        %p1225 = scmp.lt.s32.totalorder %s21, 1
        %s1226 = scalar_select %p1225, %s21, 1
        %s1227 = smul.addr %s1226, 8
        %s1228 = scalar_lea.vmem %s9, %s1227
        // Predicated region
        $region61: #{tpu_custom_call.1} parent=55 // pred_check
          %p1229 = pneg %p233
        $region62: #{tpu_custom_call.1} parent=55 // pred_check_branch
          %1231 = sbr.rel (%p1229) target = $region64
        $region63: #{tpu_custom_call.1} parent=55 // pred_region
          _
        $region64: #{tpu_custom_call.1} parent=55 // pred_fallthru
          _
      $region56: #{tpu_custom_call.1} parent=5 // pred_fallthru
        _
      %p1232 = scmp.le.s32.totalorder 2, %s16
      // Predicated region
      $region65: #{tpu_custom_call.1} parent=5 // pred_check
        %p1233 = pneg %p1232
      $region66: #{tpu_custom_call.1} parent=5 // pred_check_branch
        %1235 = sbr.rel (%p1233) target = $region68
      $region67: #{tpu_custom_call.1} parent=5 // pred_region
        %s1236 = ssub.s32 %s16, 2
        // Predicated region
        $region69: #{tpu_custom_call.1} parent=67 // pred_check
          %p1237 = pneg %p239
        $region70: #{tpu_custom_call.1} parent=67 // pred_check_branch
          %1239 = sbr.rel (%p1237) target = $region72
        $region71: #{tpu_custom_call.1} parent=67 // pred_region
          %p1240 = scmp.lt.s32.totalorder %s22, 1
          %s1241 = scalar_select %p1240, %s22, 1
          %s1242 = smul.addr %s1241, 8
          %s1243 = scalar_lea.vmem %s9, %s1242
        $region72: #{tpu_custom_call.1} parent=67 // pred_fallthru
          _
      $region68: #{tpu_custom_call.1} parent=5 // pred_fallthru
        _
    $region6: #{tpu_custom_call.1} parent=1 // loop_footer
      %s20 = sadd.s32 1, %s16
    $region7: #{tpu_custom_call.1} parent=1 // loop_footer_branch
      %15 = sbr.rel target = $region3
    $region8: #{tpu_custom_call.1} parent=1 // loop_exit
      _
    %1244 = vsyncpa [#allocation3], 1
    %s1245 = scalar_lea.sflag [#allocation3], 1
    %1246 = vsyncpa %s1245, 1

</llo_original>
